<compile_context>
chip_gen: v7x
topology: tpu7x:2x2x1
jax: 0.10.0
libtpu: 0.0.40
codegen_flags: <defaults>
</compile_context>

<pallas_src>
import functools

import jax
import jax.numpy as jnp
from jax.experimental import pallas as pl
from jax.experimental.pallas import tpu as pltpu


def _round_up(x, m):
    return ((x + m - 1) // m) * m


def _nce_agce_kernel(pred_ref, labels_ref, out_ref, *, tiles_per_part, tile_n,
                     n_total, a, q, alpha, beta):
    i = pl.program_id(0)          # batch partition (parallel / megacore axis)
    k = pl.program_id(1)          # tile within the partition (reduction axis)

    # Zero the resident per-lane accumulator at the start of every partition.
    @pl.when(k == 0)
    def _():
        out_ref[...] = jnp.zeros_like(out_ref)

    logits = pred_ref[...].astype(jnp.float32)       # (C, TN) lane-dense
    labels = labels_ref[...]                         # (1, TN) int32
    c, tn = logits.shape

    # Mask for padded batch columns (last tile of a partition may be partial).
    col0 = (i * tiles_per_part + k) * tile_n
    lane = jax.lax.broadcasted_iota(jnp.int32, (1, tn), 1)
    valid = (col0 + lane) < n_total                  # (1, TN)

    # Numerically stable softmax / log-softmax along the class (sublane) axis.
    m = jnp.max(logits, axis=0, keepdims=True)       # (1, TN)
    z = logits - m
    e = jnp.exp(z)
    s = jnp.sum(e, axis=0, keepdims=True)            # (1, TN), >= 1
    logp = z - jnp.log(s)                            # (C, TN) log-softmax
    p = e * pl.reciprocal(s, approx=True)            # (C, TN) softmax

    # One-hot gather of the target class via a sublane iota compare.
    class_ids = jax.lax.broadcasted_iota(jnp.int32, (c, tn), 0)
    onehot = class_ids == labels                     # (C, TN) bool

    # NCE: logp_y / sum_c logp (both negative -> flip signs, positive recip).
    logp_y = jnp.sum(jnp.where(onehot, logp, 0.0), axis=0, keepdims=True)
    sum_logp = jnp.sum(logp, axis=0, keepdims=True)
    nce_per = (-logp_y) * pl.reciprocal(-sum_logp, approx=True)   # (1, TN)

    # AGCE: ((a+1)^q - (a + p_y)^q) / q
    p_y = jnp.sum(jnp.where(onehot, p, 0.0), axis=0, keepdims=True)
    ap = a + p_y
    if q == 2.0:              # static branch: VPU multiply instead of EUP pow
        ap_q = ap * ap
    elif q == 1.0:
        ap_q = ap
    else:
        ap_q = jnp.power(ap, q)
    agce_per = (jnp.float32((a + 1.0) ** q) - ap_q) * jnp.float32(1.0 / q)

    per = jnp.float32(alpha) * nce_per + jnp.float32(beta) * agce_per
    per = jnp.where(valid, per, 0.0)                 # drop padded columns
    out_ref[...] += per.reshape(out_ref.shape)


def nce_and_agce_loss(pred, labels, *, num_classes=10, a=1.0, q=2.0,
                      alpha=1.0, beta=1.0, tile_n=512, num_parts=2):
    """pred: (N, C) logits (any float dtype); labels: (N,) ints. Scalar f32 loss."""
    n, c = pred.shape
    assert c == num_classes
    assert a > 0.0, "AGCE requires a > 0 (pow of a + p_y must stay positive)"

    tile_n = min(tile_n, _round_up(n, 128))          # multiple of 128 lanes
    num_tiles = pl.cdiv(n, tile_n)
    num_parts = max(1, min(num_parts, num_tiles))    # 2-way split for v7x TCs
    tiles_per_part = pl.cdiv(num_tiles, num_parts)
    n_pad = num_parts * tiles_per_part * tile_n

    # Lane-dense layout: batch on the 128-lane axis, classes on sublanes.
    # Keep the native dtype; the f32 cast happens on the VPU inside the kernel.
    pred_t = jnp.pad(jnp.transpose(pred, (1, 0)), ((0, 0), (0, n_pad - n)))
    labels_row = jnp.pad(labels.astype(jnp.int32).reshape(1, n),
                         ((0, 0), (0, n_pad - n)))

    kernel = functools.partial(
        _nce_agce_kernel, tiles_per_part=tiles_per_part, tile_n=tile_n,
        n_total=n, a=float(a), q=float(q), alpha=float(alpha), beta=float(beta))

    bytes_in = (pred_t.size * pred_t.dtype.itemsize + labels_row.size * 4)
    cost = pl.CostEstimate(
        flops=20 * n_pad * c,
        transcendentals=n_pad * (c + 3),
        bytes_accessed=bytes_in + num_parts * tile_n * 4)

    partials = pl.pallas_call(
        kernel,
        out_shape=jax.ShapeDtypeStruct((num_parts, 1, tile_n), jnp.float32),
        grid_spec=pltpu.PrefetchScalarGridSpec(
            num_scalar_prefetch=0,
            grid=(num_parts, tiles_per_part),
            in_specs=[
                pl.BlockSpec((c, tile_n),
                             lambda i, k: (0, i * tiles_per_part + k)),
                pl.BlockSpec((1, tile_n),
                             lambda i, k: (0, i * tiles_per_part + k)),
            ],
            out_specs=pl.BlockSpec((1, 1, tile_n), lambda i, k: (i, 0, 0)),
        ),
        compiler_params=pltpu.CompilerParams(
            dimension_semantics=("parallel", "arbitrary")),
        cost_estimate=cost,
    )(pred_t, labels_row)

    return jnp.sum(partials) * jnp.float32(1.0 / n)


def _reference(pred, labels, *, num_classes=10, a=1.0, q=2.0,
               alpha=1.0, beta=1.0):
    pred = pred.astype(jnp.float32)
    logp = jax.nn.log_softmax(pred, axis=1)
    p = jax.nn.softmax(pred, axis=1)
    onehot = jax.nn.one_hot(labels, num_classes, dtype=jnp.float32)
    nce = (-jnp.sum(onehot * logp, axis=1)) / (-jnp.sum(logp, axis=1))
    agce = ((a + 1.0) ** q - jnp.power(a + jnp.sum(onehot * p, axis=1), q)) / q
    return alpha * nce.mean() + beta * agce.mean()


if __name__ == "__main__":
    key = jax.random.PRNGKey(0)
    k1, k2 = jax.random.split(key)
    batch, num_classes = 8, 10
    pred = jax.random.normal(k1, (batch, num_classes), dtype=jnp.float32)
    labels = jax.random.randint(k2, (batch,), 0, num_classes, dtype=jnp.int32)

    loss = nce_and_agce_loss(pred, labels, num_classes=num_classes,
                             a=1.0, q=2.0, alpha=1.0, beta=1.0)
    loss = jax.block_until_ready(loss)

    ref = _reference(pred, labels, num_classes=num_classes,
                     a=1.0, q=2.0, alpha=1.0, beta=1.0)
    # Slightly relaxed tolerance: approx (EUP) reciprocals are used in-kernel.
    assert jnp.allclose(loss, ref, rtol=2e-3, atol=1e-5), (loss, ref)
    print("KERNEL_OK")
</pallas_src>

<mosaic_0001>
module attributes {stable_mosaic.version = 11 : i64} {
  func.func @_nce_agce_kernel(%arg0: i32, %arg1: i32, %arg2: memref<10x128xf32, #tpu.memory_space<vmem>>, %arg3: memref<1x128xi32, #tpu.memory_space<vmem>>, %arg4: memref<1x1x128xf32, #tpu.memory_space<vmem>>) attributes {dimension_semantics = [#tpu.dimension_semantics<parallel>, #tpu.dimension_semantics<arbitrary>], iteration_bounds = array<i64: 1, 1>, scalar_prefetch = 0 : i64, scratch_operands = 0 : i64, tpu.core_type = #tpu.core_type<tc>, window_params = [{transform_indices = @transform_0, window_bounds = array<i64: 10, 128>}, {transform_indices = @transform_1, window_bounds = array<i64: 1, 128>}, {transform_indices = @transform_2, window_bounds = array<i64: 1, 1, 128>}]} {
    %c0_i32 = arith.constant 0 : i32
    %0 = arith.cmpi eq, %arg1, %c0_i32 : i32
    %1 = arith.extui %0 : i1 to i32
    %c0_i32_0 = arith.constant 0 : i32
    %2 = arith.cmpi ne, %1, %c0_i32_0 : i32
    scf.if %2 {
      %cst_24 = arith.constant 0.000000e+00 : f32
      %63 = vector.broadcast %cst_24 : f32 to vector<1x1x128xf32>
      %c0_25 = arith.constant 0 : index
      %c0_26 = arith.constant 0 : index
      %c0_27 = arith.constant 0 : index
      %64 = vector.load %arg4[%c0_25, %c0_26, %c0_27] : memref<1x1x128xf32, #tpu.memory_space<vmem>>, vector<1x1x128xf32>
      tpu.vector_store %arg4[%c0_25, %c0_26, %c0_27], %63 {strides = array<i32>} : memref<1x1x128xf32, #tpu.memory_space<vmem>>, vector<1x1x128xf32>,
    } else {
    }
    %c0 = arith.constant 0 : index
    %c0_1 = arith.constant 0 : index
    %3 = vector.load %arg2[%c0, %c0_1] : memref<10x128xf32, #tpu.memory_space<vmem>>, vector<10x128xf32>
    %c0_2 = arith.constant 0 : index
    %c0_3 = arith.constant 0 : index
    %4 = vector.load %arg3[%c0_2, %c0_3] : memref<1x128xi32, #tpu.memory_space<vmem>>, vector<1x128xi32>
    %c1_i32 = arith.constant 1 : i32
    %5 = arith.muli %arg0, %c1_i32 : i32
    %6 = arith.addi %5, %arg1 : i32
    %c128_i32 = arith.constant 128 : i32
    %7 = arith.muli %6, %c128_i32 : i32
    %8 = tpu.iota {dimensions = array<i32: 1>} : vector<1x128xi32>
    %9 = vector.broadcast %7 : i32 to vector<1x128xi32>
    %10 = arith.addi %9, %8 : vector<1x128xi32>
    %c8_i32 = arith.constant 8 : i32
    %11 = vector.broadcast %c8_i32 : i32 to vector<1x128xi32>
    %12 = arith.cmpi slt, %10, %11 : vector<1x128xi32>
    %cst = arith.constant dense<0xFF800000> : vector<128xf32>
    %13 = vector.multi_reduction <maximumf>, %3, %cst [0] : vector<10x128xf32> to vector<128xf32>
    %14 = vector.shape_cast %13 : vector<128xf32> to vector<1x128xf32>
    %15 = vector.broadcast %14 : vector<1x128xf32> to vector<10x128xf32>
    %16 = arith.subf %3, %15 : vector<10x128xf32>
    %17 = math.exp %16 : vector<10x128xf32>
    %cst_4 = arith.constant dense<0.000000e+00> : vector<128xf32>
    %18 = vector.multi_reduction <add>, %17, %cst_4 [0] : vector<10x128xf32> to vector<128xf32>
    %19 = vector.shape_cast %18 : vector<128xf32> to vector<1x128xf32>
    %20 = math.log %19 : vector<1x128xf32>
    %21 = vector.broadcast %20 : vector<1x128xf32> to vector<10x128xf32>
    %22 = arith.subf %16, %21 : vector<10x128xf32>
    %23 = tpu.reciprocal %19 {approx = true} : vector<1x128xf32> -> vector<1x128xf32>
    %24 = vector.broadcast %23 : vector<1x128xf32> to vector<10x128xf32>
    %25 = arith.mulf %17, %24 : vector<10x128xf32>
    %26 = tpu.iota {dimensions = array<i32: 0>} : vector<10x128xi32>
    %27 = vector.broadcast %4 : vector<1x128xi32> to vector<10x128xi32>
    %28 = arith.cmpi eq, %26, %27 : vector<10x128xi32>
    %cst_5 = arith.constant 0.000000e+00 : f32
    %29 = vector.broadcast %cst_5 : f32 to vector<10x128xf32>
    %30 = arith.select %28, %22, %29 : vector<10x128xi1>, vector<10x128xf32>
    %cst_6 = arith.constant dense<0.000000e+00> : vector<128xf32>
    %31 = vector.multi_reduction <add>, %30, %cst_6 [0] : vector<10x128xf32> to vector<128xf32>
    %32 = vector.shape_cast %31 : vector<128xf32> to vector<1x128xf32>
    %cst_7 = arith.constant dense<0.000000e+00> : vector<128xf32>
    %33 = vector.multi_reduction <add>, %22, %cst_7 [0] : vector<10x128xf32> to vector<128xf32>
    %34 = vector.shape_cast %33 : vector<128xf32> to vector<1x128xf32>
    %cst_8 = arith.constant 0.000000e+00 : f32
    %35 = vector.broadcast %cst_8 : f32 to vector<1x128xf32>
    %36 = arith.subf %35, %32 : vector<1x128xf32>
    %cst_9 = arith.constant 0.000000e+00 : f32
    %37 = vector.broadcast %cst_9 : f32 to vector<1x128xf32>
    %38 = arith.subf %37, %34 : vector<1x128xf32>
    %39 = tpu.reciprocal %38 {approx = true} : vector<1x128xf32> -> vector<1x128xf32>
    %40 = arith.mulf %36, %39 : vector<1x128xf32>
    %cst_10 = arith.constant 0.000000e+00 : f32
    %41 = vector.broadcast %cst_10 : f32 to vector<10x128xf32>
    %42 = arith.select %28, %25, %41 : vector<10x128xi1>, vector<10x128xf32>
    %cst_11 = arith.constant dense<0.000000e+00> : vector<128xf32>
    %43 = vector.multi_reduction <add>, %42, %cst_11 [0] : vector<10x128xf32> to vector<128xf32>
    %44 = vector.shape_cast %43 : vector<128xf32> to vector<1x128xf32>
    %cst_12 = arith.constant 1.000000e+00 : f32
    %45 = vector.broadcast %cst_12 : f32 to vector<1x128xf32>
    %46 = arith.addf %45, %44 : vector<1x128xf32>
    %47 = arith.mulf %46, %46 : vector<1x128xf32>
    %cst_13 = arith.constant 4.000000e+00 : f32
    %48 = vector.broadcast %cst_13 : f32 to vector<1x128xf32>
    %49 = arith.subf %48, %47 : vector<1x128xf32>
    %cst_14 = arith.constant 5.000000e-01 : f32
    %50 = vector.broadcast %cst_14 : f32 to vector<1x128xf32>
    %51 = arith.mulf %49, %50 : vector<1x128xf32>
    %cst_15 = arith.constant 1.000000e+00 : f32
    %52 = vector.broadcast %cst_15 : f32 to vector<1x128xf32>
    %53 = arith.mulf %52, %40 : vector<1x128xf32>
    %cst_16 = arith.constant 1.000000e+00 : f32
    %54 = vector.broadcast %cst_16 : f32 to vector<1x128xf32>
    %55 = arith.mulf %54, %51 : vector<1x128xf32>
    %56 = arith.addf %53, %55 : vector<1x128xf32>
    %cst_17 = arith.constant 0.000000e+00 : f32
    %57 = vector.broadcast %cst_17 : f32 to vector<1x128xf32>
    %58 = arith.select %12, %56, %57 : vector<1x128xi1>, vector<1x128xf32>
    %c0_18 = arith.constant 0 : index
    %c0_19 = arith.constant 0 : index
    %c0_20 = arith.constant 0 : index
    %59 = vector.load %arg4[%c0_18, %c0_19, %c0_20] : memref<1x1x128xf32, #tpu.memory_space<vmem>>, vector<1x1x128xf32>
    %60 = vector.shape_cast %58 : vector<1x128xf32> to vector<1x1x128xf32>
    %61 = arith.addf %59, %60 : vector<1x1x128xf32>
    %c0_21 = arith.constant 0 : index
    %c0_22 = arith.constant 0 : index
    %c0_23 = arith.constant 0 : index
    %62 = vector.load %arg4[%c0_21, %c0_22, %c0_23] : memref<1x1x128xf32, #tpu.memory_space<vmem>>, vector<1x1x128xf32>
    tpu.vector_store %arg4[%c0_21, %c0_22, %c0_23], %61 {strides = array<i32>} : memref<1x1x128xf32, #tpu.memory_space<vmem>>, vector<1x1x128xf32>,
    return
  }
  func.func @transform_0(%arg0: i32, %arg1: i32) -> (i32, i32) {
    %c1_i32 = arith.constant 1 : i32
    %0 = arith.muli %arg0, %c1_i32 : i32
    %1 = arith.addi %0, %arg1 : i32
    %c0_i32 = arith.constant 0 : i32
    %c0_i32_0 = arith.constant 0 : i32
    return %c0_i32, %1 : i32, i32
  }
  func.func @transform_1(%arg0: i32, %arg1: i32) -> (i32, i32) {
    %c1_i32 = arith.constant 1 : i32
    %0 = arith.muli %arg0, %c1_i32 : i32
    %1 = arith.addi %0, %arg1 : i32
    %c0_i32 = arith.constant 0 : i32
    %c0_i32_0 = arith.constant 0 : i32
    return %c0_i32, %1 : i32, i32
  }
  func.func @transform_2(%arg0: i32, %arg1: i32) -> (i32, i32, i32) {
    %c0_i32 = arith.constant 0 : i32
    %c0_i32_0 = arith.constant 0 : i32
    %c0_i32_1 = arith.constant 0 : i32
    return %arg0, %c0_i32, %c0_i32_0 : i32, i32, i32
  }
}

</mosaic_0001>

<llo_original>
// kernel: tpu_custom_call.1
$region0: #{tpu_custom_call.1}
  #allocation0 [shape = 'u32[]', space=smem, size = 0x4, offset = 0x4, fixed_abs, tag = 'smem constant byte address 0x4 - core index']
  #allocation1 [shape = 'u32[144,128]{1,0:T(1,128)}', space=vmem, size = 0x12000, scoped, tag = 'internal scratch']
  %s0 = inlined_call_operand.hbm [shape: f32[10,128], index: 0, kind: input, shape index: {}]
  %s1 = inlined_call_operand.vmem [shape: s32[1,128], index: 1, kind: input, shape index: {}]
  %s2 = inlined_call_operand.hbm [shape: f32[1,1,128], index: 2, kind: output, shape index: {}]
  %s3 = sld [smem:[#allocation0]]
  $region26: #{tpu_custom_call.1} parent=0
    _
  %s5 = ssub.s32 1, %s3
  %s6 = scalar_select 0, %s5, %s3
  $region1: #{tpu_custom_call.1} parent=0
    #allocation2 [shape = 'u8[8192]{0}', space=vmem, size = 0x2000, scoped, tag = 'input window, operand 0, single buffered']
    #allocation3 [shape = 's32[1]{0}', space=sflag, size = 0x4, scoped, tag = 'scoped memory for tpu_custom_call.1']
    #allocation4 [shape = 's32[1]{0}', space=sflag, size = 0x4, scoped, tag = 'scoped memory for tpu_custom_call.1']
    #allocation5 [shape = 'u8[512]{0}', space=vmem, size = 0x400, scoped, tag = 'output window, operand 0, single buffered']
    %7 = vsyncpa [#allocation3], 0
    %8 = vsyncpa [#allocation4], 0
    // Predicated region
    $region2: #{tpu_custom_call.1} parent=1 // pred_check
      _
    $region3: #{tpu_custom_call.1} parent=1 // pred_check_branch
      %10 = sbr.rel (0) target = $region5
    $region4: #{tpu_custom_call.1} parent=1 // pred_region
      %s11 = sadd.s32 0, 0
      %s13 = ssub.s32 256, 256
      %14 = vsyncadd [#allocation3], %s13
      %s15 = smul.addr %s11, 128
      %s16 = scalar_lea.hbm %s0, %s15
      %s17 = sshll.u32 [#allocation2], 4
      %s18 = int_to_ptr.vmem [resolvable:$true] %s17
      %23 = dma.hbm_to_vmem [thread:$0]  %s16, 256, %s18, [#allocation3], 128, 128, 8
    $region5: #{tpu_custom_call.1} parent=1 // pred_fallthru
      _
    // Predicated region
    $region6: #{tpu_custom_call.1} parent=1 // pred_check
      _
    $region7: #{tpu_custom_call.1} parent=1 // pred_check_branch
      %25 = sbr.rel (0) target = $region9
    $region8: #{tpu_custom_call.1} parent=1 // pred_region
      %s26 = sadd.s32 0, 0
      %p27 = scmp.lt.s32.totalorder %s26, 0
      %s28 = scalar_select %p27, %s26, 0
      %s29 = scalar_lea.vmem %s1, %s28
      %s30 = sadd.s32 0, 0
    $region9: #{tpu_custom_call.1} parent=1 // pred_fallthru
      _
    // Predicated region
    $region10: #{tpu_custom_call.1} parent=1 // pred_check
      _
    $region11: #{tpu_custom_call.1} parent=1 // pred_check_branch
      %32 = sbr.rel (0) target = $region13
    $region12: #{tpu_custom_call.1} parent=1 // pred_region
      %33 = dma.done [#allocation3], 256
    $region13: #{tpu_custom_call.1} parent=1 // pred_fallthru
      _
    %s34 = sadd.s32 0, 0
    %p35 = scmp.lt.s32.totalorder %s34, 0
    %s36 = scalar_select %p35, %s34, 0
    %s37 = scalar_lea.vmem %s1, %s36
    %s38 = sadd.s32 0, 0
    %s39 = sadd.s32 0, 0
    %p40 = scmp.lt.s32.totalorder %s39, 0
    %s41 = scalar_select %p40, %s39, 0
    %s42 = scalar_lea.vmem %s1, %s41
    %s43 = sadd.s32 0, 0
    %p44 = scmp.eq.s32.totalorder 0, 0
    // Predicated region
    $region14: #{tpu_custom_call.1} parent=1 // pred_check
      %p45 = pneg %p44
    $region15: #{tpu_custom_call.1} parent=1 // pred_check_branch
      %47 = sbr.rel (%p45) target = $region17
    $region16: #{tpu_custom_call.1} parent=1 // pred_region
      %48 = vst [vmem:[#allocation5] sm:$0x1] 0.0
    $region17: #{tpu_custom_call.1} parent=1 // pred_fallthru
      _
    %v49 = vld [vmem:[#allocation2] sm:$0xff]
    %v50 = vld [vmem:[#allocation2 + $0x8] sm:$0x3]
    %v51 = vld [vmem:[%s42] sm:$0x1]
    %s52 = sadd.s32 0, 0
    %s53 = smul.u32 %s52, 128
    %v54 = vlaneseq
    %v55 = vand.u32 %v54, 127
    %v56 = vstv %s53
    %v57 = vadd.s32 %v56, %v55
    %vm58 = vcmp.lt.s32.totalorder %v57, 8
    %vm59 = vcmask 1041408
    %v60 = vsel %vm59, %v50, -inf
    %v61 = vmax.f32 %v49, %v60
    %v62 = vrot.slane %v61, 4
    %v63 = vmax.f32 %v61, %v62
    %v64 = vrot.slane %v63, 2
    %v65 = vmax.f32 %v63, %v64
    %v66 = vrot.slane %v65, 1
    %v67 = vmax.f32 %v65, %v66
    %v68 = vsub.f32 %v49, %v67
    %v69 = vsub.f32 %v50, %v67
    %v70 = vmul.f32 %v68, 1.442695
    %v71 = vpow.pop %v70
    %v72 = vmul.f32 %v69, 1.442695
    %v73 = vpow.pop %v72
    %v74 = vsel %vm59, %v73, 0.0
    %v75 = vadd.f32 %v71, %v74
    %v76 = vrot.slane %v75, 4
    %v77 = vadd.f32 %v75, %v76
    %v78 = vrot.slane %v77, 2
    %v79 = vadd.f32 %v77, %v78
    %v80 = vrot.slane %v79, 1
    %v81 = vadd.f32 %v79, %v80
    %v82 = vlog2.pop %v81
    %v83 = vmul.f32 %v82, 0.6931472
    %v84 = vsub.f32 %v68, %v83
    %v85 = vsub.f32 %v69, %v83
    %v86 = vrcp.pop %v81
    %v87 = vmul.f32 %v71, %v86
    %v88 = vmul.f32 %v73, %v86
    %v89 = vlaneseq
    %v90 = vshrl.u32 %v89, 7
    %v91 = vadd.s32 %v90, 8
    %v92 = vlaneseq
    %v93 = vshrl.u32 %v92, 7
    %v94 = vsub.s32 0, %v93
    %v95 = vrot.slane %v51, %v94
    %vm96 = vcmp.eq.s32.totalorder %v90, %v95
    %vm97 = vcmp.eq.s32.totalorder %v91, %v95
    %v98 = vsel %vm96, %v84, 0.0
    %v99 = vsel %vm97, %v85, 0.0
    %v100 = vsel %vm59, %v99, 0.0
    %v101 = vadd.f32 %v98, %v100
    %v102 = vrot.slane %v101, 4
    %v103 = vadd.f32 %v101, %v102
    %v104 = vrot.slane %v103, 2
    %v105 = vadd.f32 %v103, %v104
    %v106 = vrot.slane %v105, 1
    %v107 = vadd.f32 %v105, %v106
    %v108 = vsel %vm59, %v85, 0.0
    %v109 = vadd.f32 %v84, %v108
    %v110 = vrot.slane %v109, 4
    %v111 = vadd.f32 %v109, %v110
    %v112 = vrot.slane %v111, 2
    %v113 = vadd.f32 %v111, %v112
    %v114 = vrot.slane %v113, 1
    %v115 = vadd.f32 %v113, %v114
    %v116 = vsub.f32 0.0, %v107
    %v117 = vsub.f32 0.0, %v115
    %v118 = vrcp.pop %v117
    %v119 = vmul.f32 %v116, %v118
    %v120 = vsel %vm96, %v87, 0.0
    %v121 = vsel %vm97, %v88, 0.0
    %v122 = vsel %vm59, %v121, 0.0
    %v123 = vadd.f32 %v120, %v122
    %v124 = vrot.slane %v123, 4
    %v125 = vadd.f32 %v123, %v124
    %v126 = vrot.slane %v125, 2
    %v127 = vadd.f32 %v125, %v126
    %v128 = vrot.slane %v127, 1
    %v129 = vadd.f32 %v127, %v128
    %v130 = vadd.f32 %v129, 1.0
    %v131 = vmul.f32 %v130, %v130
    %v132 = vsub.f32 4.0, %v131
    %v133 = vmul.f32 %v132, 0.5
    %v134 = vadd.f32 %v119, %v133
    %v135 = vsel %vm58, %v134, 0.0
    %v136 = vld [vmem:[#allocation5] sm:$0x1]
    %v137 = vadd.f32 %v136, %v135
    %138 = vst [vmem:[#allocation5] sm:$0x1] %v137
    // Predicated region
    $region18: #{tpu_custom_call.1} parent=1 // pred_check
      _
    $region19: #{tpu_custom_call.1} parent=1 // pred_check_branch
      %140 = sbr.rel (0) target = $region21
    $region20: #{tpu_custom_call.1} parent=1 // pred_region
      %s142 = ssub.s32 16, 16
      %143 = vsyncadd [#allocation4], %s142
      %s145 = sshll.u32 [#allocation5], 4
      %s146 = int_to_ptr.vmem [resolvable:$true] %s145
      %148 = dma.vmem_to_hbm [thread:$0]  %s146, 16, %s2, [#allocation4]
    $region21: #{tpu_custom_call.1} parent=1 // pred_fallthru
      _
    // Predicated region
    $region22: #{tpu_custom_call.1} parent=1 // pred_check
      _
    $region23: #{tpu_custom_call.1} parent=1 // pred_check_branch
      %150 = sbr.rel (0) target = $region25
    $region24: #{tpu_custom_call.1} parent=1 // pred_region
      %151 = dma.done [#allocation4], 16
    $region25: #{tpu_custom_call.1} parent=1 // pred_fallthru
      _
    %152 = vsyncpa [#allocation3], 1
    %153 = vsyncpa [#allocation4], 1

</llo_original>
